<compile_context>
chip_gen: v7x
topology: tpu7x:2x2x1
jax: 0.10.0
libtpu: 0.0.40
codegen_flags: <defaults>
</compile_context>

<pallas_src>
import jax
import jax.numpy as jnp
from jax.experimental import pallas as pl
from jax.experimental.pallas import tpu as pltpu


def _abs_kernel(x_ref, o_ref):
    # Elementwise |x|; exact in every real dtype, so compute natively.
    o_ref[...] = jnp.abs(x_ref[...])


def _abs_2d(x2d, *, target_block_bytes, donate_input=False):
    """Pallas |x| over a lane-dense (rows, C) slab, C a multiple of 128."""
    rows, C = x2d.shape
    itemsize = jnp.dtype(x2d.dtype).itemsize
    # Sublane packing multiple: 8 for 32-bit, 16 for 16-bit, 32 for 8-bit dtypes.
    sub = max(8, 32 // itemsize)

    # Rows per block targeting ~target_block_bytes, rounded to the packing multiple.
    tr = max(sub, (target_block_bytes // (C * itemsize)) // sub * sub)
    # Ensure >= 2 grid steps when possible so dimension_semantics=("parallel",)
    # actually shards work across both v7x TensorCores for mid-size inputs.
    if rows >= 2 * sub:
        tr = min(tr, max(sub, ((rows // 2) // sub) * sub))
    tr = min(tr, rows)

    grid = (pl.cdiv(rows, tr),)

    # Scoped VMEM: double-buffered input + output blocks plus headroom,
    # clamped to stay well inside v7x's 64 MiB/TC physical VMEM.
    block_bytes = tr * C * itemsize
    vmem_limit = min(max(4 * block_bytes + (4 << 20), 16 << 20), 48 << 20)

    return pl.pallas_call(
        _abs_kernel,
        out_shape=jax.ShapeDtypeStruct((rows, C), x2d.dtype),
        grid_spec=pl.GridSpec(
            grid=grid,
            in_specs=[pl.BlockSpec((tr, C), lambda i: (i, 0))],
            out_specs=pl.BlockSpec((tr, C), lambda i: (i, 0)),
        ),
        compiler_params=pltpu.CompilerParams(
            dimension_semantics=("parallel",),   # megacore sharding on v7x
            vmem_limit_bytes=vmem_limit,
        ),
        # Opt-in: halves HBM footprint. Only beneficial if the caller donates x
        # at the jit boundary; otherwise XLA inserts a copy, so default off.
        input_output_aliases=({0: 0} if donate_input else {}),
    )(x2d)


def brelu(x, *, target_block_bytes=8 << 20, donate_input=False):
    """BReLU forward: elementwise absolute value (matches torch.abs(x))."""
    orig_shape = x.shape
    total = x.size

    if total == 0:
        return jnp.abs(x)
    if jnp.issubdtype(x.dtype, jnp.complexfloating):
        # torch.abs(complex) returns the real magnitude (dtype changes);
        # no Pallas benefit, defer to XLA.
        return jnp.abs(x)

    x_flat = jnp.ravel(x)

    # Pick the widest lane-dense width that divides the element count.
    # rows does NOT need to be a multiple of 8: only the BlockSpec block_shape
    # must be (8,128)-divisible, and Pallas masks the partial last row-block.
    C = None
    for cand in (2048, 1024, 512, 256, 128):
        if total % cand == 0:
            C = cand
            break

    if C is not None:
        out2d = _abs_2d(
            x_flat.reshape(total // C, C),
            target_block_bytes=target_block_bytes,
            donate_input=donate_input,
        )
        return out2d.reshape(orig_shape)

    # Rare unaligned case (total not a multiple of 128): run the kernel on the
    # aligned prefix and handle the <128-element tail with plain jnp.abs.
    # Avoids whole-array pad+slice (extra full HBM passes on a mem-bound op).
    main = (total // 128) * 128
    if main == 0:
        return jnp.abs(x)
    head = x_flat[:main]
    tail = x_flat[main:]
    for cand in (2048, 1024, 512, 256, 128):
        if main % cand == 0:
            C = cand
            break
    head_out = _abs_2d(
        head.reshape(main // C, C),
        target_block_bytes=target_block_bytes,
        donate_input=donate_input,
    ).reshape(-1)
    tail_out = jnp.abs(tail)
    return jnp.concatenate([head_out, tail_out]).reshape(orig_shape)


if __name__ == "__main__":
    key = jax.random.PRNGKey(0)
    x = jax.random.normal(key, (2, 4, 16, 16), dtype=jnp.float32)  # NCHW

    out = jax.block_until_ready(brelu(x))

    ref = jnp.abs(x)
    assert out.shape == x.shape
    assert out.dtype == x.dtype
    assert jnp.array_equal(out, ref)

    # Also exercise an unaligned-size path and a bf16 path for coverage.
    x2 = jax.random.normal(jax.random.PRNGKey(1), (3, 5, 7), dtype=jnp.float32)
    assert jnp.array_equal(jax.block_until_ready(brelu(x2)), jnp.abs(x2))
    x3 = jax.random.normal(jax.random.PRNGKey(2), (4, 16, 32), dtype=jnp.bfloat16)
    assert jnp.array_equal(jax.block_until_ready(brelu(x3)), jnp.abs(x3))

    print("KERNEL_OK")
</pallas_src>

<mosaic_0001>
module attributes {stable_mosaic.version = 11 : i64} {
  func.func @_abs_kernel(%arg0: i32, %arg1: memref<1x2048xf32, #tpu.memory_space<vmem>>, %arg2: memref<1x2048xf32, #tpu.memory_space<vmem>>) attributes {dimension_semantics = [#tpu.dimension_semantics<parallel>], iteration_bounds = array<i64: 1>, scalar_prefetch = 0 : i64, scratch_operands = 0 : i64, tpu.core_type = #tpu.core_type<tc>, window_params = [{transform_indices = @transform_0, window_bounds = array<i64: 1, 2048>}, {transform_indices = @transform_1, window_bounds = array<i64: 1, 2048>}]} {
    %c0 = arith.constant 0 : index
    %c0_0 = arith.constant 0 : index
    %0 = vector.load %arg1[%c0, %c0_0] : memref<1x2048xf32, #tpu.memory_space<vmem>>, vector<1x2048xf32>
    %1 = math.absf %0 : vector<1x2048xf32>
    %c0_1 = arith.constant 0 : index
    %c0_2 = arith.constant 0 : index
    %2 = vector.load %arg2[%c0_1, %c0_2] : memref<1x2048xf32, #tpu.memory_space<vmem>>, vector<1x2048xf32>
    tpu.vector_store %arg2[%c0_1, %c0_2], %1 {strides = array<i32>} : memref<1x2048xf32, #tpu.memory_space<vmem>>, vector<1x2048xf32>,
    return
  }
  func.func @transform_0(%arg0: i32) -> (i32, i32) {
    %c0_i32 = arith.constant 0 : i32
    %c0_i32_0 = arith.constant 0 : i32
    return %arg0, %c0_i32 : i32, i32
  }
  func.func @transform_1(%arg0: i32) -> (i32, i32) {
    %c0_i32 = arith.constant 0 : i32
    %c0_i32_0 = arith.constant 0 : i32
    return %arg0, %c0_i32 : i32, i32
  }
}

</mosaic_0001>

<llo_original>
// kernel: tpu_custom_call.1
$region0: #{tpu_custom_call.1}
  #allocation0 [shape = 'u32[]', space=smem, size = 0x4, offset = 0x4, fixed_abs, tag = 'smem constant byte address 0x4 - core index']
  #allocation1 [shape = 'u32[144,128]{1,0:T(1,128)}', space=vmem, size = 0x12000, scoped, tag = 'internal scratch']
  %s0 = inlined_call_operand.hbm [shape: f32[1,2048], index: 0, kind: input, shape index: {}]
  %s1 = inlined_call_operand.hbm [shape: f32[1,2048], index: 1, kind: output, shape index: {}]
  %s2 = sld [smem:[#allocation0]]
  $region18: #{tpu_custom_call.1} parent=0
    _
  %s4 = ssub.s32 1, %s2
  %s5 = scalar_select 0, %s4, %s2
  $region1: #{tpu_custom_call.1} parent=0
    #allocation2 [shape = 'u8[8192]{0}', space=vmem, size = 0x2000, scoped, tag = 'input window, operand 0, single buffered']
    #allocation3 [shape = 's32[1]{0}', space=sflag, size = 0x4, scoped, tag = 'scoped memory for tpu_custom_call.1']
    #allocation4 [shape = 's32[1]{0}', space=sflag, size = 0x4, scoped, tag = 'scoped memory for tpu_custom_call.1']
    #allocation5 [shape = 'u8[8192]{0}', space=vmem, size = 0x2000, scoped, tag = 'output window, operand 0, single buffered']
    %6 = vsyncpa [#allocation3], 0
    %7 = vsyncpa [#allocation4], 0
    // Predicated region
    $region2: #{tpu_custom_call.1} parent=1 // pred_check
      _
    $region3: #{tpu_custom_call.1} parent=1 // pred_check_branch
      %9 = sbr.rel (0) target = $region5
    $region4: #{tpu_custom_call.1} parent=1 // pred_region
      %s11 = ssub.s32 256, 256
      %12 = vsyncadd [#allocation3], %s11
      %s14 = sshll.u32 [#allocation2], 4
      %s15 = int_to_ptr.vmem [resolvable:$true] %s14
      %17 = dma.hbm_to_vmem [thread:$0]  %s0, 256, %s15, [#allocation3]
    $region5: #{tpu_custom_call.1} parent=1 // pred_fallthru
      _
    // Predicated region
    $region6: #{tpu_custom_call.1} parent=1 // pred_check
      _
    $region7: #{tpu_custom_call.1} parent=1 // pred_check_branch
      %19 = sbr.rel (0) target = $region9
    $region8: #{tpu_custom_call.1} parent=1 // pred_region
      %20 = dma.done [#allocation3], 256
    $region9: #{tpu_custom_call.1} parent=1 // pred_fallthru
      _
    %v21 = vld [vmem:[#allocation2] sm:$0xff]
    %v22 = vld [vmem:[#allocation2 + $0x8] sm:$0xff]
    %v23 = vand.u32 2147483647, %v21
    %v24 = vand.u32 2147483647, %v22
    %25 = vst [vmem:[#allocation5] sm:$0xff] %v23
    %26 = vst [vmem:[#allocation5 + $0x8] sm:$0xff] %v24
    // Predicated region
    $region10: #{tpu_custom_call.1} parent=1 // pred_check
      _
    $region11: #{tpu_custom_call.1} parent=1 // pred_check_branch
      %28 = sbr.rel (0) target = $region13
    $region12: #{tpu_custom_call.1} parent=1 // pred_region
      %s30 = ssub.s32 256, 256
      %31 = vsyncadd [#allocation4], %s30
      %s33 = sshll.u32 [#allocation5], 4
      %s34 = int_to_ptr.vmem [resolvable:$true] %s33
      %36 = dma.vmem_to_hbm [thread:$0]  %s34, 256, %s1, [#allocation4]
    $region13: #{tpu_custom_call.1} parent=1 // pred_fallthru
      _
    // Predicated region
    $region14: #{tpu_custom_call.1} parent=1 // pred_check
      _
    $region15: #{tpu_custom_call.1} parent=1 // pred_check_branch
      %38 = sbr.rel (0) target = $region17
    $region16: #{tpu_custom_call.1} parent=1 // pred_region
      %39 = dma.done [#allocation4], 256
    $region17: #{tpu_custom_call.1} parent=1 // pred_fallthru
      _
    %40 = vsyncpa [#allocation3], 1
    %41 = vsyncpa [#allocation4], 1

</llo_original>
